<compile_context>
chip_gen: v7x
topology: tpu7x:2x2x1
jax: 0.10.0
libtpu: 0.0.40
codegen_flags: <defaults>
</compile_context>

<pallas_src>
import functools

import numpy as np
import jax
import jax.numpy as jnp
from jax.experimental import pallas as pl
from jax.experimental.pallas import tpu as pltpu

EPS = 1e-6  # matches nn.PairwiseDistance(eps=1e-6) and the module's self.eps


def _center_distance_kernel(probs_ref, centers_ref, grid_ref, out_ref, *,
                            r0_sq, r1_sq):
    # probs_ref:   (Bt, C, D, W*H)  any float dtype; upcast to f32 after DMA
    # centers_ref: (Bt, 4, D, 1)    rows = [y_ica, x_ica, y_eca, x_eca]
    # grid_ref:    (2, W*H)         rows = [grid_y_flat, grid_x_flat]
    # out_ref:     (Bt, 1, 128)     per-batch partial sums (lane-broadcast)
    bt = out_ref.shape[0]

    # Channel-summed probability slab (mask is channel-independent, so the
    # channel sum can be factored out), upcast to f32 after the DMA.
    p = jnp.sum(probs_ref[...].astype(jnp.float32), axis=1)      # (Bt, D, WH)

    c = centers_ref[...]                                         # (Bt, 4, D, 1)
    g = grid_ref[...]                                            # (2, WH)
    gy = g[0:1, :]                                               # (1, WH)
    gx = g[1:2, :]

    tys = (c[:, 0], c[:, 2])                                     # (Bt, D, 1)
    txs = (c[:, 1], c[:, 3])
    radii_sq = (r0_sq, r1_sq)

    # "Farther than radius[1] from artery a's center" masks, via squared
    # distances (exact equivalent of sqrt(d2) > r since both sides are >= 0).
    masks = []
    for a in range(2):
        dy = gy - tys[a] + EPS       # PairwiseDistance adds eps to the diff
        dx = gx - txs[a] + EPS
        masks.append(dy * dy + dx * dx > radii_sq[a])            # (Bt, D, WH)

    acc = jnp.zeros((bt, 1, 1), jnp.float32)
    for a in range(2):
        # art_masks are swapped in the reference module; fused mask apply.
        m = jnp.where(masks[1 - a], p, 0.0)                      # (Bt, D, WH)
        den = jnp.sum(m, axis=-1, keepdims=True)                 # (Bt, D, 1)
        sy = jnp.sum(m * gy, axis=-1, keepdims=True)
        sx = jnp.sum(m * gx, axis=-1, keepdims=True)
        inv = pl.reciprocal(den + EPS, approx=True)              # one EUP recip
        ddy = sy * inv - tys[a] + EPS
        ddx = sx * inv - txs[a] + EPS
        dist = jnp.sqrt(ddy * ddy + ddx * ddx)                   # (Bt, D, 1)
        valid = (tys[a] != -1.0).astype(jnp.float32)             # negpair check
        acc = acc + jnp.sum(dist * valid, axis=1, keepdims=True) # (Bt, 1, 1)

    out_ref[...] = jnp.broadcast_to(acc, out_ref.shape)


def center_distance_loss(probs, target_i, target_e, radiuses, *, b_tile=1):
    """probs: (B, C, D, W, H); target_*: (B, D, 2); radiuses: np.array (2, >=2)."""
    probs = jnp.asarray(probs)           # keep input dtype (bf16 halves HBM DMA)
    B, C, D, W, H = probs.shape
    WH = W * H
    assert B % b_tile == 0, "b_tile must divide the batch size"
    r0_sq = float(radiuses[0][1]) ** 2
    r1_sq = float(radiuses[1][1]) ** 2

    # Lane-dense layout: (B, C, D, W*H); row-major reshape -> free.
    probs_flat = probs.reshape(B, C, D, WH)

    # Per-depth center columns: (B, 4, D, 1) rows = [y_i, x_i, y_e, x_e].
    t0 = jnp.asarray(target_i, jnp.float32)
    t1 = jnp.asarray(target_e, jnp.float32)
    centers = jnp.stack(
        [t0[:, :, 0], t0[:, :, 1], t1[:, :, 0], t1[:, :, 1]], axis=1)[..., None]

    # Flattened meshgrid rows [grid_y, grid_x]: (2, W*H).
    gy, gx = jnp.meshgrid(jnp.arange(W, dtype=jnp.float32),
                          jnp.arange(H, dtype=jnp.float32), indexing="ij")
    grid_yx = jnp.stack([gy.reshape(-1), gx.reshape(-1)], axis=0)

    kernel = functools.partial(_center_distance_kernel, r0_sq=r0_sq, r1_sq=r1_sq)

    partial_sums = pl.pallas_call(
        kernel,
        out_shape=jax.ShapeDtypeStruct((B, 1, 128), jnp.float32),
        grid=(B // b_tile,),
        in_specs=[
            pl.BlockSpec((b_tile, C, D, WH), lambda i: (i, 0, 0, 0)),
            pl.BlockSpec((b_tile, 4, D, 1), lambda i: (i, 0, 0, 0)),
            pl.BlockSpec((2, WH), lambda i: (0, 0)),
        ],
        out_specs=pl.BlockSpec((b_tile, 1, 128), lambda i: (i, 0, 0)),
        compiler_params=pltpu.CompilerParams(
            dimension_semantics=("parallel",)),
    )(probs_flat, centers, grid_yx)

    # Per-batch partial sums -> mean over all (B, D) pairs (matches .mean()).
    return jnp.sum(partial_sums[:, 0, 0]) / (B * D)


def reference_loss(probs, targets, radiuses):
    """Pure-JAX reference mirroring the PyTorch forward (f32 probs)."""
    B, C, D, W, H = probs.shape
    gy, gx = jnp.meshgrid(jnp.arange(W, dtype=jnp.float32),
                          jnp.arange(H, dtype=jnp.float32), indexing="ij")
    art_masks = []
    for t, r in zip(targets, radiuses):
        dy = gy[None, None] - t[:, :, 0][:, :, None, None] + EPS
        dx = gx[None, None] - t[:, :, 1][:, :, None, None] + EPS
        d2 = jnp.sqrt(dy * dy + dx * dx)                        # (B, D, W, H)
        art_masks.append((d2 > float(r[1])).astype(jnp.float32))
    art_masks = [art_masks[1], art_masks[0]]
    loss = jnp.float32(0.0)
    for t, am in zip(targets, art_masks):
        valid = (t[:, :, 0] != -1.0).astype(jnp.float32)        # (B, D)
        w = am[:, None] * probs                                 # (B, C, D, W, H)
        den = w.sum(axis=(1, 3, 4))
        ycnt = (w * gy[None, None, None]).sum(axis=(1, 3, 4)) / (den + EPS)
        xcnt = (w * gx[None, None, None]).sum(axis=(1, 3, 4)) / (den + EPS)
        dist = jnp.sqrt((ycnt - t[:, :, 0] + EPS) ** 2 +
                        (xcnt - t[:, :, 1] + EPS) ** 2)
        loss = loss + (dist * valid).mean()
    return loss


if __name__ == "__main__":
    B, C, D, W, H = 2, 2, 4, 16, 16
    key = jax.random.PRNGKey(0)
    k1, k2, k3 = jax.random.split(key, 3)

    logits = jax.random.normal(k1, (B, C, D, W, H), jnp.float32)
    # Keep probs bf16 in HBM (half the DMA bytes); the kernel upcasts to f32.
    probs = jax.nn.sigmoid(logits).astype(jnp.bfloat16)

    target_i = jax.random.uniform(k2, (B, D, 2), jnp.float32, 1.0, float(W - 2))
    target_e = jax.random.uniform(k3, (B, D, 2), jnp.float32, 1.0, float(W - 2))
    # mark a couple of (b, d) entries as "no center line" (negpair = [-1, -1])
    target_i = target_i.at[0, 1].set(jnp.array([-1.0, -1.0], jnp.float32))
    target_e = target_e.at[1, 3].set(jnp.array([-1.0, -1.0], jnp.float32))

    radiuses = np.array([[2.0, 3.0], [2.5, 3.5]], dtype=np.float32)

    loss = center_distance_loss(probs, target_i, target_e, radiuses)
    loss = jax.block_until_ready(loss)

    # Reference runs on the exact same (bf16-rounded) probabilities in f32, so
    # the only numerics delta is the approximate reciprocal (~1e-4 relative).
    ref = reference_loss(probs.astype(jnp.float32), [target_i, target_e],
                         radiuses)
    assert np.allclose(np.asarray(loss), np.asarray(ref), rtol=5e-3, atol=5e-3), (
        float(loss), float(ref))

    print("KERNEL_OK")
</pallas_src>

<mosaic_0001>
module attributes {stable_mosaic.version = 11 : i64} {
  func.func @_center_distance_kernel(%arg0: i32, %arg1: memref<1x2x4x256xbf16, #tpu.memory_space<vmem>>, %arg2: memref<1x4x4x1xf32, #tpu.memory_space<vmem>>, %arg3: memref<2x256xf32, #tpu.memory_space<vmem>>, %arg4: memref<1x1x128xf32, #tpu.memory_space<vmem>>) attributes {dimension_semantics = [#tpu.dimension_semantics<parallel>], iteration_bounds = array<i64: 2>, scalar_prefetch = 0 : i64, scratch_operands = 0 : i64, tpu.core_type = #tpu.core_type<tc>, window_params = [{transform_indices = @transform_0, window_bounds = array<i64: 1, 2, 4, 256>}, {transform_indices = @transform_1, window_bounds = array<i64: 1, 4, 4, 1>}, {pipeline_mode = #tpu.pipeline_mode<synchronous>, transform_indices = @transform_2, window_bounds = array<i64: 2, 256>}, {transform_indices = @transform_3, window_bounds = array<i64: 1, 1, 128>}]} {
    %c0 = arith.constant 0 : index
    %c0_0 = arith.constant 0 : index
    %c0_1 = arith.constant 0 : index
    %c0_2 = arith.constant 0 : index
    %0 = vector.load %arg1[%c0, %c0_0, %c0_1, %c0_2] : memref<1x2x4x256xbf16, #tpu.memory_space<vmem>>, vector<1x2x4x256xbf16>
    %1 = arith.extf %0 : vector<1x2x4x256xbf16> to vector<1x2x4x256xf32>
    %cst = arith.constant dense<0.000000e+00> : vector<1x4x256xf32>
    %2 = vector.multi_reduction <add>, %1, %cst [1] : vector<1x2x4x256xf32> to vector<1x4x256xf32>
    %c0_3 = arith.constant 0 : index
    %c0_4 = arith.constant 0 : index
    %c0_5 = arith.constant 0 : index
    %c0_6 = arith.constant 0 : index
    %3 = vector.load %arg2[%c0_3, %c0_4, %c0_5, %c0_6] : memref<1x4x4x1xf32, #tpu.memory_space<vmem>>, vector<1x4x4x1xf32>
    %c0_7 = arith.constant 0 : index
    %c0_8 = arith.constant 0 : index
    %4 = vector.load %arg3[%c0_7, %c0_8] : memref<2x256xf32, #tpu.memory_space<vmem>>, vector<2x256xf32>
    %5 = vector.extract_strided_slice %4 {offsets = [0, 0], sizes = [1, 256], strides = [1, 1]} : vector<2x256xf32> to vector<1x256xf32>
    %6 = vector.extract_strided_slice %4 {offsets = [1, 0], sizes = [1, 256], strides = [1, 1]} : vector<2x256xf32> to vector<1x256xf32>
    %7 = vector.extract_strided_slice %3 {offsets = [0, 0, 0, 0], sizes = [1, 1, 4, 1], strides = [1, 1, 1, 1]} : vector<1x4x4x1xf32> to vector<1x1x4x1xf32>
    %8 = vector.shape_cast %7 : vector<1x1x4x1xf32> to vector<1x4x1xf32>
    %9 = vector.extract_strided_slice %3 {offsets = [0, 2, 0, 0], sizes = [1, 1, 4, 1], strides = [1, 1, 1, 1]} : vector<1x4x4x1xf32> to vector<1x1x4x1xf32>
    %10 = vector.shape_cast %9 : vector<1x1x4x1xf32> to vector<1x4x1xf32>
    %11 = vector.extract_strided_slice %3 {offsets = [0, 1, 0, 0], sizes = [1, 1, 4, 1], strides = [1, 1, 1, 1]} : vector<1x4x4x1xf32> to vector<1x1x4x1xf32>
    %12 = vector.shape_cast %11 : vector<1x1x4x1xf32> to vector<1x4x1xf32>
    %13 = vector.extract_strided_slice %3 {offsets = [0, 3, 0, 0], sizes = [1, 1, 4, 1], strides = [1, 1, 1, 1]} : vector<1x4x4x1xf32> to vector<1x1x4x1xf32>
    %14 = vector.shape_cast %13 : vector<1x1x4x1xf32> to vector<1x4x1xf32>
    %15 = vector.shape_cast %5 : vector<1x256xf32> to vector<1x1x256xf32>
    %16 = vector.broadcast %15 : vector<1x1x256xf32> to vector<1x4x256xf32>
    %17 = vector.broadcast %8 : vector<1x4x1xf32> to vector<1x4x256xf32>
    %18 = arith.subf %16, %17 : vector<1x4x256xf32>
    %cst_9 = arith.constant 9.99999997E-7 : f32
    %19 = vector.broadcast %cst_9 : f32 to vector<1x4x256xf32>
    %20 = arith.addf %18, %19 : vector<1x4x256xf32>
    %21 = vector.shape_cast %6 : vector<1x256xf32> to vector<1x1x256xf32>
    %22 = vector.broadcast %21 : vector<1x1x256xf32> to vector<1x4x256xf32>
    %23 = vector.broadcast %12 : vector<1x4x1xf32> to vector<1x4x256xf32>
    %24 = arith.subf %22, %23 : vector<1x4x256xf32>
    %cst_10 = arith.constant 9.99999997E-7 : f32
    %25 = vector.broadcast %cst_10 : f32 to vector<1x4x256xf32>
    %26 = arith.addf %24, %25 : vector<1x4x256xf32>
    %27 = arith.mulf %20, %20 : vector<1x4x256xf32>
    %28 = arith.mulf %26, %26 : vector<1x4x256xf32>
    %29 = arith.addf %27, %28 : vector<1x4x256xf32>
    %cst_11 = arith.constant 9.000000e+00 : f32
    %30 = vector.broadcast %cst_11 : f32 to vector<1x4x256xf32>
    %31 = arith.cmpf ogt, %29, %30 : vector<1x4x256xf32>
    %32 = vector.shape_cast %5 : vector<1x256xf32> to vector<1x1x256xf32>
    %33 = vector.broadcast %32 : vector<1x1x256xf32> to vector<1x4x256xf32>
    %34 = vector.broadcast %10 : vector<1x4x1xf32> to vector<1x4x256xf32>
    %35 = arith.subf %33, %34 : vector<1x4x256xf32>
    %cst_12 = arith.constant 9.99999997E-7 : f32
    %36 = vector.broadcast %cst_12 : f32 to vector<1x4x256xf32>
    %37 = arith.addf %35, %36 : vector<1x4x256xf32>
    %38 = vector.shape_cast %6 : vector<1x256xf32> to vector<1x1x256xf32>
    %39 = vector.broadcast %38 : vector<1x1x256xf32> to vector<1x4x256xf32>
    %40 = vector.broadcast %14 : vector<1x4x1xf32> to vector<1x4x256xf32>
    %41 = arith.subf %39, %40 : vector<1x4x256xf32>
    %cst_13 = arith.constant 9.99999997E-7 : f32
    %42 = vector.broadcast %cst_13 : f32 to vector<1x4x256xf32>
    %43 = arith.addf %41, %42 : vector<1x4x256xf32>
    %44 = arith.mulf %37, %37 : vector<1x4x256xf32>
    %45 = arith.mulf %43, %43 : vector<1x4x256xf32>
    %46 = arith.addf %44, %45 : vector<1x4x256xf32>
    %cst_14 = arith.constant 1.225000e+01 : f32
    %47 = vector.broadcast %cst_14 : f32 to vector<1x4x256xf32>
    %48 = arith.cmpf ogt, %46, %47 : vector<1x4x256xf32>
    %cst_15 = arith.constant 0.000000e+00 : f32
    %49 = vector.broadcast %cst_15 : f32 to vector<1x1x1xf32>
    %cst_16 = arith.constant 0.000000e+00 : f32
    %50 = vector.broadcast %cst_16 : f32 to vector<1x4x256xf32>
    %51 = arith.select %48, %2, %50 : vector<1x4x256xi1>, vector<1x4x256xf32>
    %cst_17 = arith.constant dense<0.000000e+00> : vector<1x4xf32>
    %52 = vector.multi_reduction <add>, %51, %cst_17 [2] : vector<1x4x256xf32> to vector<1x4xf32>
    %53 = vector.shape_cast %52 : vector<1x4xf32> to vector<1x4x1xf32>
    %54 = vector.shape_cast %5 : vector<1x256xf32> to vector<1x1x256xf32>
    %55 = vector.broadcast %54 : vector<1x1x256xf32> to vector<1x4x256xf32>
    %56 = arith.mulf %51, %55 : vector<1x4x256xf32>
    %cst_18 = arith.constant dense<0.000000e+00> : vector<1x4xf32>
    %57 = vector.multi_reduction <add>, %56, %cst_18 [2] : vector<1x4x256xf32> to vector<1x4xf32>
    %58 = vector.shape_cast %57 : vector<1x4xf32> to vector<1x4x1xf32>
    %59 = vector.shape_cast %6 : vector<1x256xf32> to vector<1x1x256xf32>
    %60 = vector.broadcast %59 : vector<1x1x256xf32> to vector<1x4x256xf32>
    %61 = arith.mulf %51, %60 : vector<1x4x256xf32>
    %cst_19 = arith.constant dense<0.000000e+00> : vector<1x4xf32>
    %62 = vector.multi_reduction <add>, %61, %cst_19 [2] : vector<1x4x256xf32> to vector<1x4xf32>
    %63 = vector.shape_cast %62 : vector<1x4xf32> to vector<1x4x1xf32>
    %cst_20 = arith.constant 9.99999997E-7 : f32
    %64 = vector.broadcast %cst_20 : f32 to vector<1x4x1xf32>
    %65 = arith.addf %53, %64 : vector<1x4x1xf32>
    %66 = tpu.reciprocal %65 {approx = true} : vector<1x4x1xf32> -> vector<1x4x1xf32>
    %67 = arith.mulf %58, %66 : vector<1x4x1xf32>
    %68 = arith.subf %67, %8 : vector<1x4x1xf32>
    %cst_21 = arith.constant 9.99999997E-7 : f32
    %69 = vector.broadcast %cst_21 : f32 to vector<1x4x1xf32>
    %70 = arith.addf %68, %69 : vector<1x4x1xf32>
    %71 = arith.mulf %63, %66 : vector<1x4x1xf32>
    %72 = arith.subf %71, %12 : vector<1x4x1xf32>
    %cst_22 = arith.constant 9.99999997E-7 : f32
    %73 = vector.broadcast %cst_22 : f32 to vector<1x4x1xf32>
    %74 = arith.addf %72, %73 : vector<1x4x1xf32>
    %75 = arith.mulf %70, %70 : vector<1x4x1xf32>
    %76 = arith.mulf %74, %74 : vector<1x4x1xf32>
    %77 = arith.addf %75, %76 : vector<1x4x1xf32>
    %78 = math.sqrt %77 : vector<1x4x1xf32>
    %cst_23 = arith.constant -1.000000e+00 : f32
    %79 = vector.broadcast %cst_23 : f32 to vector<1x4x1xf32>
    %80 = arith.cmpf one, %8, %79 : vector<1x4x1xf32>
    %81 = arith.extui %80 : vector<1x4x1xi1> to vector<1x4x1xi32>
    %82 = arith.sitofp %81 : vector<1x4x1xi32> to vector<1x4x1xf32>
    %83 = arith.mulf %78, %82 : vector<1x4x1xf32>
    %cst_24 = arith.constant dense<0.000000e+00> : vector<1x1xf32>
    %84 = vector.multi_reduction <add>, %83, %cst_24 [1] : vector<1x4x1xf32> to vector<1x1xf32>
    %85 = vector.shape_cast %84 : vector<1x1xf32> to vector<1x1x1xf32>
    %86 = arith.addf %49, %85 : vector<1x1x1xf32>
    %cst_25 = arith.constant 0.000000e+00 : f32
    %87 = vector.broadcast %cst_25 : f32 to vector<1x4x256xf32>
    %88 = arith.select %31, %2, %87 : vector<1x4x256xi1>, vector<1x4x256xf32>
    %cst_26 = arith.constant dense<0.000000e+00> : vector<1x4xf32>
    %89 = vector.multi_reduction <add>, %88, %cst_26 [2] : vector<1x4x256xf32> to vector<1x4xf32>
    %90 = vector.shape_cast %89 : vector<1x4xf32> to vector<1x4x1xf32>
    %91 = vector.shape_cast %5 : vector<1x256xf32> to vector<1x1x256xf32>
    %92 = vector.broadcast %91 : vector<1x1x256xf32> to vector<1x4x256xf32>
    %93 = arith.mulf %88, %92 : vector<1x4x256xf32>
    %cst_27 = arith.constant dense<0.000000e+00> : vector<1x4xf32>
    %94 = vector.multi_reduction <add>, %93, %cst_27 [2] : vector<1x4x256xf32> to vector<1x4xf32>
    %95 = vector.shape_cast %94 : vector<1x4xf32> to vector<1x4x1xf32>
    %96 = vector.shape_cast %6 : vector<1x256xf32> to vector<1x1x256xf32>
    %97 = vector.broadcast %96 : vector<1x1x256xf32> to vector<1x4x256xf32>
    %98 = arith.mulf %88, %97 : vector<1x4x256xf32>
    %cst_28 = arith.constant dense<0.000000e+00> : vector<1x4xf32>
    %99 = vector.multi_reduction <add>, %98, %cst_28 [2] : vector<1x4x256xf32> to vector<1x4xf32>
    %100 = vector.shape_cast %99 : vector<1x4xf32> to vector<1x4x1xf32>
    %cst_29 = arith.constant 9.99999997E-7 : f32
    %101 = vector.broadcast %cst_29 : f32 to vector<1x4x1xf32>
    %102 = arith.addf %90, %101 : vector<1x4x1xf32>
    %103 = tpu.reciprocal %102 {approx = true} : vector<1x4x1xf32> -> vector<1x4x1xf32>
    %104 = arith.mulf %95, %103 : vector<1x4x1xf32>
    %105 = arith.subf %104, %10 : vector<1x4x1xf32>
    %cst_30 = arith.constant 9.99999997E-7 : f32
    %106 = vector.broadcast %cst_30 : f32 to vector<1x4x1xf32>
    %107 = arith.addf %105, %106 : vector<1x4x1xf32>
    %108 = arith.mulf %100, %103 : vector<1x4x1xf32>
    %109 = arith.subf %108, %14 : vector<1x4x1xf32>
    %cst_31 = arith.constant 9.99999997E-7 : f32
    %110 = vector.broadcast %cst_31 : f32 to vector<1x4x1xf32>
    %111 = arith.addf %109, %110 : vector<1x4x1xf32>
    %112 = arith.mulf %107, %107 : vector<1x4x1xf32>
    %113 = arith.mulf %111, %111 : vector<1x4x1xf32>
    %114 = arith.addf %112, %113 : vector<1x4x1xf32>
    %115 = math.sqrt %114 : vector<1x4x1xf32>
    %cst_32 = arith.constant -1.000000e+00 : f32
    %116 = vector.broadcast %cst_32 : f32 to vector<1x4x1xf32>
    %117 = arith.cmpf one, %10, %116 : vector<1x4x1xf32>
    %118 = arith.extui %117 : vector<1x4x1xi1> to vector<1x4x1xi32>
    %119 = arith.sitofp %118 : vector<1x4x1xi32> to vector<1x4x1xf32>
    %120 = arith.mulf %115, %119 : vector<1x4x1xf32>
    %cst_33 = arith.constant dense<0.000000e+00> : vector<1x1xf32>
    %121 = vector.multi_reduction <add>, %120, %cst_33 [1] : vector<1x4x1xf32> to vector<1x1xf32>
    %122 = vector.shape_cast %121 : vector<1x1xf32> to vector<1x1x1xf32>
    %123 = arith.addf %86, %122 : vector<1x1x1xf32>
    %124 = vector.shape_cast %123 : vector<1x1x1xf32> to vector<1x1x1xf32>
    %125 = vector.broadcast %124 : vector<1x1x1xf32> to vector<1x1x128xf32>
    %c0_34 = arith.constant 0 : index
    %c0_35 = arith.constant 0 : index
    %c0_36 = arith.constant 0 : index
    %126 = vector.load %arg4[%c0_34, %c0_35, %c0_36] : memref<1x1x128xf32, #tpu.memory_space<vmem>>, vector<1x1x128xf32>
    tpu.vector_store %arg4[%c0_34, %c0_35, %c0_36], %125 {strides = array<i32>} : memref<1x1x128xf32, #tpu.memory_space<vmem>>, vector<1x1x128xf32>,
    return
  }
  func.func @transform_0(%arg0: i32) -> (i32, i32, i32, i32) {
    %c0_i32 = arith.constant 0 : i32
    %c0_i32_0 = arith.constant 0 : i32
    %c0_i32_1 = arith.constant 0 : i32
    %c0_i32_2 = arith.constant 0 : i32
    return %arg0, %c0_i32, %c0_i32_0, %c0_i32_1 : i32, i32, i32, i32
  }
  func.func @transform_1(%arg0: i32) -> (i32, i32, i32, i32) {
    %c0_i32 = arith.constant 0 : i32
    %c0_i32_0 = arith.constant 0 : i32
    %c0_i32_1 = arith.constant 0 : i32
    %c0_i32_2 = arith.constant 0 : i32
    return %arg0, %c0_i32, %c0_i32_0, %c0_i32_1 : i32, i32, i32, i32
  }
  func.func @transform_2(%arg0: i32) -> (i32, i32) {
    %c0_i32 = arith.constant 0 : i32
    %c0_i32_0 = arith.constant 0 : i32
    %c0_i32_1 = arith.constant 0 : i32
    return %c0_i32, %c0_i32_0 : i32, i32
  }
  func.func @transform_3(%arg0: i32) -> (i32, i32, i32) {
    %c0_i32 = arith.constant 0 : i32
    %c0_i32_0 = arith.constant 0 : i32
    %c0_i32_1 = arith.constant 0 : i32
    return %arg0, %c0_i32, %c0_i32_0 : i32, i32, i32
  }
}

</mosaic_0001>

<llo_original>
// kernel: tpu_custom_call.1
$region0: #{tpu_custom_call.1}
  #allocation0 [shape = 'u32[]', space=smem, size = 0x4, offset = 0x4, fixed_abs, tag = 'smem constant byte address 0x4 - core index']
  #allocation1 [shape = 'u32[144,128]{1,0:T(1,128)}', space=vmem, size = 0x12000, scoped, tag = 'internal scratch']
  %s0 = inlined_call_operand.vmem [shape: bf16[2,2,4,256], index: 0, kind: input, shape index: {}]
  %s1 = inlined_call_operand.vmem [shape: f32[2,4,4,1], index: 1, kind: input, shape index: {}]
  %s2 = inlined_call_operand.vmem [shape: f32[2,256], index: 2, kind: input, shape index: {}]
  %s3 = inlined_call_operand.hbm [shape: f32[2,1,128], index: 3, kind: output, shape index: {}]
  %s4 = sld [smem:[#allocation0]]
  $region45: #{tpu_custom_call.1} parent=0
    _
  %s6 = ssub.s32 1, %s4
  %s7 = scalar_select 0, %s6, %s4
  $region1: #{tpu_custom_call.1} parent=0
    #allocation2 [shape = 'u8[1024]{0}', space=vmem, size = 0x400, scoped, tag = 'output window, operand 0']
    #allocation3 [shape = 's32[2]{0}', space=sflag, size = 0x8, scoped, tag = 'scoped memory for tpu_custom_call.1']
    %8 = vsyncpa [#allocation3], 0
    %s9 = scalar_lea.sflag [#allocation3], 1
    %10 = vsyncpa %s9, 0
    loop: start=0, step=1, limit=4
    $region2: #{tpu_custom_call.1} parent=1 // loop_pre_header
      _
    $region3: #{tpu_custom_call.1} parent=1 // loop_header
      %s12 = sphi 0, %s16
      %p13 = scmp.ge.s32.totalorder %s12, 4
      %s22 = sphi 0, %s24
      %s25 = sphi 0, %s22
      %s26 = sphi 0, %s25
      %s42 = sphi 0, %s26
      %s48 = sphi 0, %s50
      %s51 = sphi 0, %s48
      %s52 = sphi 0, %s51
      %s68 = sphi 0, %s52
      %s72 = sphi 0, %s72
      %s74 = sphi 0, %s72
      %s75 = sphi 0, %s74
      %s89 = sphi 0, %s75
      %s95 = sphi 0, %s97
      %s98 = sphi 0, %s95
      %s99 = sphi 0, %s98
      %s115 = sphi 0, %s99
    $region4: #{tpu_custom_call.1} parent=1 // loop_header_branch
      %15 = sbr.rel (%p13) target = $region8
    $region5: #{tpu_custom_call.1} parent=1 // loop_body
      %s17 = ssub.s32 %s12, 1
      %s18 = ssub.s32 %s12, 2
      %s19 = sadd.s32 %s12, 1
      %s20 = ssub.s32 %s12, %s19
      %p21 = scmp.eq.s32.totalorder %s20, 0
      %s23 = sadd.s32 %s22, 1
      %s24 = scalar_select %p21, %s22, %s23
      %p27 = pneg %p21
      %p28 = scmp.eq.s32.totalorder %s12, 1
      %p29 = por %p27, %p28
      %p30 = scmp.ne.s32.totalorder %s22, %s25
      %p31 = scmp.eq.s32.totalorder %s12, 0
      %p32 = por %p30, %p31
      %p33 = scmp.ne.s32.totalorder %s22, %s25
      %p34 = scmp.eq.s32.totalorder %s17, 1
      %p35 = por %p33, %p34
      %p36 = scmp.ne.s32.totalorder %s25, %s26
      %p37 = scmp.eq.s32.totalorder %s17, 0
      %p38 = por %p36, %p37
      %p39 = scmp.ne.s32.totalorder %s25, %s26
      %p40 = scmp.eq.s32.totalorder %s18, 1
      %p41 = por %p39, %p40
      %p43 = scmp.ne.s32.totalorder %s26, %s42
      %p44 = scmp.eq.s32.totalorder %s18, 0
      %p45 = por %p43, %p44
      %s46 = ssub.s32 %s12, %s19
      %p47 = scmp.eq.s32.totalorder %s46, 0
      %s49 = sadd.s32 %s48, 1
      %s50 = scalar_select %p47, %s48, %s49
      %p53 = pneg %p47
      %p54 = scmp.eq.s32.totalorder %s12, 1
      %p55 = por %p53, %p54
      %p56 = scmp.ne.s32.totalorder %s48, %s51
      %p57 = scmp.eq.s32.totalorder %s12, 0
      %p58 = por %p56, %p57
      %p59 = scmp.ne.s32.totalorder %s48, %s51
      %p60 = scmp.eq.s32.totalorder %s17, 1
      %p61 = por %p59, %p60
      %p62 = scmp.ne.s32.totalorder %s51, %s52
      %p63 = scmp.eq.s32.totalorder %s17, 0
      %p64 = por %p62, %p63
      %p65 = scmp.ne.s32.totalorder %s51, %s52
      %p66 = scmp.eq.s32.totalorder %s18, 1
      %p67 = por %p65, %p66
      %p69 = scmp.ne.s32.totalorder %s52, %s68
      %p70 = scmp.eq.s32.totalorder %s18, 0
      %p71 = por %p69, %p70
      %s73 = sadd.s32 %s72, 1
      %p76 = scmp.eq.s32.totalorder %s12, 1
      %p77 = scmp.ne.s32.totalorder %s72, %s74
      %p78 = scmp.eq.s32.totalorder %s12, 0
      %p79 = por %p77, %p78
      %p80 = scmp.ne.s32.totalorder %s72, %s74
      %p81 = scmp.eq.s32.totalorder %s17, 1
      %p82 = por %p80, %p81
      %p83 = scmp.ne.s32.totalorder %s74, %s75
      %p84 = scmp.eq.s32.totalorder %s17, 0
      %p85 = por %p83, %p84
      %p86 = scmp.ne.s32.totalorder %s74, %s75
      %p87 = scmp.eq.s32.totalorder %s18, 1
      %p88 = por %p86, %p87
      %p90 = scmp.ne.s32.totalorder %s75, %s89
      %p91 = scmp.eq.s32.totalorder %s18, 0
      %p92 = por %p90, %p91
      %s93 = ssub.s32 %s12, %s19
      %p94 = scmp.eq.s32.totalorder %s93, 0
      %s96 = sadd.s32 %s95, 1
      %s97 = scalar_select %p94, %s95, %s96
      %p100 = pneg %p94
      %p101 = scmp.eq.s32.totalorder %s12, 1
      %p102 = por %p100, %p101
      %p103 = scmp.ne.s32.totalorder %s95, %s98
      %p104 = scmp.eq.s32.totalorder %s12, 0
      %p105 = por %p103, %p104
      %p106 = scmp.ne.s32.totalorder %s95, %s98
      %p107 = scmp.eq.s32.totalorder %s17, 1
      %p108 = por %p106, %p107
      %p109 = scmp.ne.s32.totalorder %s98, %s99
      %p110 = scmp.eq.s32.totalorder %s17, 0
      %p111 = por %p109, %p110
      %p112 = scmp.ne.s32.totalorder %s98, %s99
      %p113 = scmp.eq.s32.totalorder %s18, 1
      %p114 = por %p112, %p113
      %p116 = scmp.ne.s32.totalorder %s99, %s115
      %p117 = scmp.eq.s32.totalorder %s18, 0
      %p118 = por %p116, %p117
      %p119 = scmp.le.s32.totalorder 1, %s12
      %p120 = scmp.lt.s32.totalorder %s12, 3
      %p121 = pnand %p119, %p120
      %p122 = pneg %p121
      // Predicated region
      $region9: #{tpu_custom_call.1} parent=5 // pred_check
        _
      $region10: #{tpu_custom_call.1} parent=5 // pred_check_branch
        %124 = sbr.rel (%p121) target = $region12
      $region11: #{tpu_custom_call.1} parent=5 // pred_region
        %s125 = ssub.s32 %s12, 1
        // Predicated region
        $region13: #{tpu_custom_call.1} parent=11 // pred_check
          %p126 = pneg %p85
        $region14: #{tpu_custom_call.1} parent=11 // pred_check_branch
          %128 = sbr.rel (%p126) target = $region16
        $region15: #{tpu_custom_call.1} parent=11 // pred_region
          _
        $region16: #{tpu_custom_call.1} parent=11 // pred_fallthru
          _
      $region12: #{tpu_custom_call.1} parent=5 // pred_fallthru
        _
      %p129 = scmp.lt.s32.totalorder %s12, 2
      // Predicated region
      $region17: #{tpu_custom_call.1} parent=5 // pred_check
        %p130 = pneg %p129
      $region18: #{tpu_custom_call.1} parent=5 // pred_check_branch
        %132 = sbr.rel (%p130) target = $region20
      $region19: #{tpu_custom_call.1} parent=5 // pred_region
        // Predicated region
        $region21: #{tpu_custom_call.1} parent=19 // pred_check
          %p133 = pneg %p32
        $region22: #{tpu_custom_call.1} parent=19 // pred_check_branch
          %135 = sbr.rel (%p133) target = $region24
        $region23: #{tpu_custom_call.1} parent=19 // pred_region
          %p136 = scmp.lt.s32.totalorder %s12, 1
          %s137 = scalar_select %p136, %s12, 1
          %s138 = smul.addr %s137, 4
          %s139 = smul.addr %s138, 2
          %s140 = scalar_lea.vmem %s0, %s139
        $region24: #{tpu_custom_call.1} parent=19 // pred_fallthru
          _
        // Predicated region
        $region25: #{tpu_custom_call.1} parent=19 // pred_check
          %p141 = pneg %p58
        $region26: #{tpu_custom_call.1} parent=19 // pred_check_branch
          %143 = sbr.rel (%p141) target = $region28
        $region27: #{tpu_custom_call.1} parent=19 // pred_region
          %p144 = scmp.lt.s32.totalorder %s12, 1
          %s145 = scalar_select %p144, %s12, 1
          %s146 = smul.addr %s145, 4
          %s147 = smul.addr %s146, 4
          %s148 = scalar_lea.vmem %s1, %s147
        $region28: #{tpu_custom_call.1} parent=19 // pred_fallthru
          _
      $region20: #{tpu_custom_call.1} parent=5 // pred_fallthru
        _
      %p149 = scmp.le.s32.totalorder 1, %s12
      %p150 = scmp.lt.s32.totalorder %s12, 3
      %p151 = pnand %p149, %p150
      %p152 = pneg %p151
      // Predicated region
      $region29: #{tpu_custom_call.1} parent=5 // pred_check
        _
      $region30: #{tpu_custom_call.1} parent=5 // pred_check_branch
        %154 = sbr.rel (%p151) target = $region32
      $region31: #{tpu_custom_call.1} parent=5 // pred_region
        %s155 = ssub.s32 %s12, 1
        %p156 = scmp.lt.s32.totalorder %s17, 1
        %s157 = scalar_select %p156, %s17, 1
        %s158 = smul.addr %s157, 4
        %s159 = smul.addr %s158, 2
        %s160 = scalar_lea.vmem %s0, %s159
        %p161 = pneg %p38
        %p162 = pneg %p35
        %p163 = scmp.lt.s32.totalorder %s17, 1
        %s164 = scalar_select %p163, %s17, 1
        %s165 = smul.addr %s164, 4
        %s166 = smul.addr %s165, 4
        %s167 = scalar_lea.vmem %s1, %s166
        %p168 = pneg %p64
        %p169 = pneg %p61
        %p170 = pneg %p85
        %p171 = pneg %p82
        %p172 = pneg %p111
        %p173 = pneg %p108
        %s174 = sand.u32 %s98, 1
        %s175 = scalar_lea.sflag [#allocation3], %s174
        %s176 = sand.u32 %s98, 1
        %s177 = scalar_lea.vmem [#allocation2], %s176
        %p178 = scmp.lt.s32.totalorder %s17, 1
        %s179 = scalar_select %p178, %s17, 1
        %s180 = smul.addr %s179, 4
        %s181 = smul.addr %s180, 2
        %s182 = scalar_lea.vmem %s0, %s181
        %p183 = scmp.lt.s32.totalorder %s17, 1
        %s184 = scalar_select %p183, %s17, 1
        %s185 = smul.addr %s184, 4
        %s186 = smul.addr %s185, 4
        %s187 = scalar_lea.vmem %s1, %s186
        %v188 = vld [vmem:[%s182] sm:$0xf]
        %v189 = vld [vmem:[%s182 + $0x4] sm:$0xf]
        %v190 = vunpack.c.l.bf16 %v188
        %v191 = vunpack.c.l.bf16 %v189
        %v194 = vcombine.high %v190, %v190
        %v195 = vcombine.high %v191, %v191
        %vm198 = vcmask 1043456
        %v199 = vsel %vm198, %v190, 0.0
        %v200 = vsel %vm198, %v191, 0.0
        %v201 = vadd.f32 %v199, %v200
        %v202 = vsel %vm198, %v194, 0.0
        %v203 = vsel %vm198, %v195, 0.0
        %v204 = vadd.f32 %v202, %v203
        %v205 = vld [vmem:[%s187] sm:$0xf]
        %v206 = vld [vmem:[%s187 + $0x4] sm:$0xf]
        %v207 = vld [vmem:[%s187 + $0x8] sm:$0xf]
        %v208 = vld [vmem:[%s187 + $0xc] sm:$0xf]
        %v209 = vld [vmem:[%s2] sm:$0xf]
        %v211 = vlaneseq
        %v212 = vshrl.u32 %v211, 7
        %v213 = vsub.s32 0, %v212
        %v214 = vrot.slane %v209, %v213
        %v215 = vlaneseq
        %v216 = vshrl.u32 %v215, 7
        %v217 = vsub.s32 2, %v216
        %v218 = vrot.slane %v209, %v217
        %v221 = vlaneseq
        %v222 = vshrl.u32 %v221, 7
        %v223 = vsub.s32 0, %v222
        %v224 = vrot.slane %v214, %v223
        %v225 = vlaneseq
        %v226 = vshrl.u32 %v225, 7
        %v227 = vsub.s32 0, %v226
        %v228 = vrot.slane %v218, %v227
        %230 = vset.pattern.permute.xlu0 0
        %231 = vperm.xlu0 %230, %v205
        %v232 = vpop.permute.xlu0 %231
        %v234 = vsub.f32 %v224, %v232
        %v235 = vsub.f32 %v228, %v232
        %v236 = vadd.f32 %v234, 1e-06
        %v237 = vadd.f32 %v235, 1e-06
        %v238 = vlaneseq
        %v239 = vshrl.u32 %v238, 7
        %v240 = vsub.s32 1, %v239
        %v241 = vrot.slane %v209, %v240
        %v242 = vlaneseq
        %v243 = vshrl.u32 %v242, 7
        %v244 = vsub.s32 3, %v243
        %v245 = vrot.slane %v209, %v244
        %v248 = vlaneseq
        %v249 = vshrl.u32 %v248, 7
        %v250 = vsub.s32 1, %v249
        %v251 = vrot.slane %v241, %v250
        %v252 = vlaneseq
        %v253 = vshrl.u32 %v252, 7
        %v254 = vsub.s32 1, %v253
        %v255 = vrot.slane %v245, %v254
        %257 = vset.pattern.permute.xlu0 0
        %258 = vperm.xlu0 %257, %v206
        %v259 = vpop.permute.xlu0 %258
        %v261 = vsub.f32 %v251, %v259
        %v262 = vsub.f32 %v255, %v259
        %v263 = vadd.f32 %v261, 1e-06
        %v264 = vadd.f32 %v262, 1e-06
        %v265 = vmul.f32 %v236, %v236
        %v266 = vmul.f32 %v237, %v237
        %v267 = vmul.f32 %v263, %v263
        %v268 = vmul.f32 %v264, %v264
        %v269 = vadd.f32 %v265, %v267
        %v270 = vadd.f32 %v266, %v268
        %vm271 = vcmp.gt.f32.partialorder %v269, 9.0
        %vm272 = vcmp.gt.f32.partialorder %v270, 9.0
        %274 = vset.pattern.permute.xlu0 0
        %275 = vperm.xlu0 %274, %v207
        %v276 = vpop.permute.xlu0 %275
        %v278 = vsub.f32 %v224, %v276
        %v279 = vsub.f32 %v228, %v276
        %v280 = vadd.f32 %v278, 1e-06
        %v281 = vadd.f32 %v279, 1e-06
        %283 = vset.pattern.permute.xlu0 0
        %284 = vperm.xlu0 %283, %v208
        %v285 = vpop.permute.xlu0 %284
        %v287 = vsub.f32 %v251, %v285
        %v288 = vsub.f32 %v255, %v285
        %v289 = vadd.f32 %v287, 1e-06
        %v290 = vadd.f32 %v288, 1e-06
        %v291 = vmul.f32 %v280, %v280
        %v292 = vmul.f32 %v281, %v281
        %v293 = vmul.f32 %v289, %v289
        %v294 = vmul.f32 %v290, %v290
        %v295 = vadd.f32 %v291, %v293
        %v296 = vadd.f32 %v292, %v294
        %vm297 = vcmp.gt.f32.partialorder %v295, 12.25
        %vm298 = vcmp.gt.f32.partialorder %v296, 12.25
        %v299 = vsel %vm297, %v201, 0.0
        %v300 = vsel %vm298, %v204, 0.0
        %v301 = vsel %vm198, %v299, 0.0
        %v302 = vsel %vm198, %v300, 0.0
        %v303 = vadd.f32 %v301, %v302
        %304 = vadd.xlane.f32.xlu0 %v303
        %v305 = vpop.xlane.xlu0 %304
        %v306 = vmul.f32 %v299, %v224
        %v307 = vmul.f32 %v300, %v228
        %v308 = vsel %vm198, %v306, 0.0
        %v309 = vsel %vm198, %v307, 0.0
        %v310 = vadd.f32 %v308, %v309
        %311 = vadd.xlane.f32.xlu0 %v310
        %v312 = vpop.xlane.xlu0 %311
        %v313 = vmul.f32 %v299, %v251
        %v314 = vmul.f32 %v300, %v255
        %v315 = vsel %vm198, %v313, 0.0
        %v316 = vsel %vm198, %v314, 0.0
        %v317 = vadd.f32 %v315, %v316
        %318 = vadd.xlane.f32.xlu0 %v317
        %v319 = vpop.xlane.xlu0 %318
        %v320 = vadd.f32 %v305, 1e-06
        %v321 = vrcp.pop %v320
        %v322 = vmul.f32 %v312, %v321
        %v323 = vsub.f32 %v322, %v205
        %v324 = vadd.f32 %v323, 1e-06
        %v325 = vmul.f32 %v319, %v321
        %v326 = vsub.f32 %v325, %v206
        %v327 = vadd.f32 %v326, 1e-06
        %v328 = vmul.f32 %v324, %v324
        %v329 = vmul.f32 %v327, %v327
        %v330 = vadd.f32 %v328, %v329
        %v331 = vrsqrt.pop %v330
        %v332 = vmul.f32 %v330, %v331
        %vm333 = vcmp.eq.f32.partialorder %v330, inf
        %v334 = vsel %vm333, %v330, %v332
        %vm335 = vcmp.eq.f32.partialorder %v330, 0.0
        %v336 = vand.u32 %v330, 2147483648
        %v337 = vsel %vm335, %v336, %v334
        %vm338 = vcmp.ne.f32.partialorder %v205, -1.0
        %v339 = vsel %vm338, 1, 0
        %v340 = vcvt.s32.f32 %v339
        %v341 = vmul.f32 %v337, %v340
        %vm342 = vcmask 3072
        %v343 = vsel %vm342, %v341, 0.0
        %v344 = vrot.slane %v343, 4
        %v345 = vadd.f32 %v343, %v344
        %v346 = vrot.slane %v345, 2
        %v347 = vadd.f32 %v345, %v346
        %v348 = vrot.slane %v347, 1
        %v349 = vadd.f32 %v347, %v348
        %v350 = vadd.f32 %v349, 0.0
        %v351 = vsel %vm271, %v201, 0.0
        %v352 = vsel %vm272, %v204, 0.0
        %v353 = vsel %vm198, %v351, 0.0
        %v354 = vsel %vm198, %v352, 0.0
        %v355 = vadd.f32 %v353, %v354
        %356 = vadd.xlane.f32.xlu0 %v355
        %v357 = vpop.xlane.xlu0 %356
        %v358 = vmul.f32 %v351, %v224
        %v359 = vmul.f32 %v352, %v228
        %v360 = vsel %vm198, %v358, 0.0
        %v361 = vsel %vm198, %v359, 0.0
        %v362 = vadd.f32 %v360, %v361
        %363 = vadd.xlane.f32.xlu0 %v362
        %v364 = vpop.xlane.xlu0 %363
        %v365 = vmul.f32 %v351, %v251
        %v366 = vmul.f32 %v352, %v255
        %v367 = vsel %vm198, %v365, 0.0
        %v368 = vsel %vm198, %v366, 0.0
        %v369 = vadd.f32 %v367, %v368
        %370 = vadd.xlane.f32.xlu0 %v369
        %v371 = vpop.xlane.xlu0 %370
        %v372 = vadd.f32 %v357, 1e-06
        %v373 = vrcp.pop %v372
        %v374 = vmul.f32 %v364, %v373
        %v375 = vsub.f32 %v374, %v207
        %v376 = vadd.f32 %v375, 1e-06
        %v377 = vmul.f32 %v371, %v373
        %v378 = vsub.f32 %v377, %v208
        %v379 = vadd.f32 %v378, 1e-06
        %v380 = vmul.f32 %v376, %v376
        %v381 = vmul.f32 %v379, %v379
        %v382 = vadd.f32 %v380, %v381
        %v383 = vrsqrt.pop %v382
        %v384 = vmul.f32 %v382, %v383
        %vm385 = vcmp.eq.f32.partialorder %v382, inf
        %v386 = vsel %vm385, %v382, %v384
        %vm387 = vcmp.eq.f32.partialorder %v382, 0.0
        %v388 = vand.u32 %v382, 2147483648
        %v389 = vsel %vm387, %v388, %v386
        %vm390 = vcmp.ne.f32.partialorder %v207, -1.0
        %v391 = vsel %vm390, 1, 0
        %v392 = vcvt.s32.f32 %v391
        %v393 = vmul.f32 %v389, %v392
        %v394 = vsel %vm342, %v393, 0.0
        %v395 = vrot.slane %v394, 4
        %v396 = vadd.f32 %v394, %v395
        %v397 = vrot.slane %v396, 2
        %v398 = vadd.f32 %v396, %v397
        %v399 = vrot.slane %v398, 1
        %v400 = vadd.f32 %v398, %v399
        %v401 = vadd.f32 %v350, %v400
        %403 = vset.pattern.permute.xlu0 0
        %404 = vperm.xlu0 %403, %v401
        %v405 = vpop.permute.xlu0 %404
        %407 = vst [vmem:[%s177] sm:$0x1] %v405
        %s408 = sand.u32 %s98, 1
        %s409 = scalar_lea.sflag [#allocation3], %s408
        %s410 = sand.u32 %s98, 1
        %s411 = scalar_lea.vmem [#allocation2], %s410
        // Predicated region
        $region33: #{tpu_custom_call.1} parent=31 // pred_check
          %p412 = pneg %p108
        $region34: #{tpu_custom_call.1} parent=31 // pred_check_branch
          %414 = sbr.rel (%p412) target = $region36
        $region35: #{tpu_custom_call.1} parent=31 // pred_region
          %s416 = ssub.s32 16, 16
          %417 = vsyncadd %s409, %s416
          %s418 = smul.addr %s17, 16
          %s419 = scalar_lea.hbm %s3, %s418
          %s421 = sshll.u32 %s411, 4
          %s422 = int_to_ptr.vmem [resolvable:$true] %s421
          %424 = dma.vmem_to_hbm [thread:$0]  %s422, 16, %s419, %s409
        $region36: #{tpu_custom_call.1} parent=31 // pred_fallthru
          _
      $region32: #{tpu_custom_call.1} parent=5 // pred_fallthru
        _
      %p425 = scmp.le.s32.totalorder 2, %s12
      // Predicated region
      $region37: #{tpu_custom_call.1} parent=5 // pred_check
        %p426 = pneg %p425
      $region38: #{tpu_custom_call.1} parent=5 // pred_check_branch
        %428 = sbr.rel (%p426) target = $region40
      $region39: #{tpu_custom_call.1} parent=5 // pred_region
        %s429 = ssub.s32 %s12, 2
        // Predicated region
        $region41: #{tpu_custom_call.1} parent=39 // pred_check
          %p430 = pneg %p114
        $region42: #{tpu_custom_call.1} parent=39 // pred_check_branch
          %432 = sbr.rel (%p430) target = $region44
        $region43: #{tpu_custom_call.1} parent=39 // pred_region
          %s433 = sand.u32 %s99, 1
          %s434 = scalar_lea.sflag [#allocation3], %s433
          %s435 = sand.u32 %s99, 1
          %s436 = scalar_lea.vmem [#allocation2], %s435
          %437 = dma.done %s434, 16
        $region44: #{tpu_custom_call.1} parent=39 // pred_fallthru
          _
      $region40: #{tpu_custom_call.1} parent=5 // pred_fallthru
        _
    $region6: #{tpu_custom_call.1} parent=1 // loop_footer
      %s16 = sadd.s32 1, %s12
    $region7: #{tpu_custom_call.1} parent=1 // loop_footer_branch
      %11 = sbr.rel target = $region3
    $region8: #{tpu_custom_call.1} parent=1 // loop_exit
      _
    %438 = vsyncpa [#allocation3], 1
    %s439 = scalar_lea.sflag [#allocation3], 1
    %440 = vsyncpa %s439, 1

</llo_original>
